<compile_context>
chip_gen: v7x
topology: tpu7x:2x2x1
jax: 0.10.0
libtpu: 0.0.40
codegen_flags: <defaults>
</compile_context>

<pallas_src>
import functools
import math

import jax
import jax.numpy as jnp
from jax import lax
from jax.experimental import pallas as pl
from jax.experimental.pallas import tpu as pltpu

_BN_SCALE = 1.0 / math.sqrt(1.0 + 1e-5)   # eval-mode BN with default running stats
_ACT_DTYPE = jnp.bfloat16                  # intermediate activation storage dtype
_LEAKY_ALPHA = 0.1

_AB_VMEM_BUDGET = 24 * 1024 * 1024         # budget for A+B double buffers (bytes)
_VMEM_LIMIT = 32 * 1024 * 1024             # scoped VMEM limit (safe on v5e/v6e/v7x)


# ----------------------------------------------------------------------------
# Tile-size selection (shared by weight pre-packing and the matmul wrapper).
# ----------------------------------------------------------------------------
def _round_up(x, m):
    return (x + m - 1) // m * m


def _pick_n_tiling(n):
    """(tn, Np).  tn=128 for Np<=256 so 256-wide layers keep >=2 N blocks
    (both v7x TensorCores busy); tn=256 (full MXU width) for wider layers."""
    np_ = _round_up(n, 128)
    if np_ <= 256:
        return 128, np_
    return 256, _round_up(n, 256)


def _pick_k_tiling(k, tn):
    """(tk, Kp): single K step whenever the A/B double buffers fit the VMEM
    budget (assuming worst-case tm=256); otherwise minimize steps, then pad."""
    cap = max(128, (_AB_VMEM_BUDGET // (4 * (256 + tn)) // 128) * 128)
    kp = _round_up(k, 128)
    if kp <= cap:
        return kp, kp
    best = None
    for t in range(128, cap + 1, 128):
        padded = _round_up(k, t)
        key = (padded // t, padded, -t)
        if best is None or key < best[0]:
            best = (key, t, padded)
    return best[1], best[2]


def _pick_m_tiling(m):
    mp0 = _round_up(m, 16)
    tm = min(256, mp0)
    return tm, _round_up(m, tm)


# ----------------------------------------------------------------------------
# Pallas kernel: batched tiled matmul, bf16 operands, f32 accumulation,
# fused (trace-time-specialized) LeakyReLU epilogue.
# ----------------------------------------------------------------------------
def _mm_kernel(a_ref, b_ref, o_ref, *acc_scratch, alpha, nk):
    prod = jnp.dot(a_ref[...], b_ref[...], preferred_element_type=jnp.float32)

    def epilogue(y):
        if alpha != 1.0:                              # trace-time specialization
            y = jnp.where(y >= 0.0, y, alpha * y)
        o_ref[...] = y.astype(o_ref.dtype)

    if nk == 1:                                       # no accumulator round-trip
        epilogue(prod)
    else:
        acc_ref = acc_scratch[0]
        k = pl.program_id(3)

        @pl.when(k == 0)                              # direct write, no zero-init
        def _():
            acc_ref[...] = prod

        @pl.when(jnp.logical_and(k > 0, k < nk - 1))
        def _():
            acc_ref[...] += prod

        @pl.when(k == nk - 1)
        def _():
            epilogue(acc_ref[...] + prod)


def fused_matmul(a, b_packed, K, N, alpha, out_dtype):
    """out[g] = LeakyReLU_alpha(a[g] @ b[g]).

    a:        (G, M, K)  activations (bf16 or castable)
    b_packed: (G, Kp, Np) bf16, pre-padded & (BN-)folded weights."""
    G, M, Ka = a.shape
    assert Ka == K
    tn, Np = _pick_n_tiling(N)
    tk, Kp = _pick_k_tiling(K, tn)
    tm, Mp = _pick_m_tiling(M)
    assert b_packed.shape == (G, Kp, Np), (b_packed.shape, (G, Kp, Np))

    a = a.astype(jnp.bfloat16)
    if (Mp, Kp) != (M, K):
        a = jnp.pad(a, ((0, 0), (0, Mp - M), (0, Kp - K)))

    nk = Kp // tk
    kernel = functools.partial(_mm_kernel, alpha=alpha, nk=nk)
    scratch = [pltpu.VMEM((tm, tn), jnp.float32)] if nk > 1 else []

    out_itemsize = jnp.dtype(out_dtype).itemsize
    cost = pl.CostEstimate(
        flops=2 * G * Mp * Kp * Np,
        transcendentals=0,
        bytes_accessed=int(G * (Mp * Kp * 2 + (Mp // tm) * Kp * Np * 2
                                + Mp * Np * out_itemsize)))

    out = pl.pallas_call(
        kernel,
        out_shape=jax.ShapeDtypeStruct((G, Mp, Np), out_dtype),
        grid_spec=pltpu.PrefetchScalarGridSpec(
            num_scalar_prefetch=0,
            grid=(G, Mp // tm, Np // tn, nk),
            in_specs=[
                pl.BlockSpec((None, tm, tk), lambda g, i, j, k: (g, i, k)),
                pl.BlockSpec((None, tk, tn), lambda g, i, j, k: (g, k, j)),
            ],
            out_specs=pl.BlockSpec((None, tm, tn), lambda g, i, j, k: (g, i, j)),
            scratch_shapes=scratch,
        ),
        compiler_params=pltpu.CompilerParams(
            dimension_semantics=("parallel", "parallel", "parallel", "arbitrary"),
            vmem_limit_bytes=_VMEM_LIMIT),
        cost_estimate=cost,
    )(a, b_packed)

    if (Mp, Np) != (M, N):
        out = out[:, :M, :N]
    return out


# ----------------------------------------------------------------------------
# Layer metadata (static) and weight pre-packing (runs ONCE, outside the jit).
# ----------------------------------------------------------------------------
_PARAM_SPECS = {
    "conv1": (7, 7, 2, 64),      "conv2": (5, 5, 64, 128),
    "conv3": (5, 5, 128, 256),   "conv3_1": (3, 3, 256, 256),
    "conv4": (3, 3, 256, 512),   "conv4_1": (3, 3, 512, 512),
    "conv5": (3, 3, 512, 512),   "conv5_1": (3, 3, 512, 512),
    "conv6": (3, 3, 512, 1024),  "conv6_1": (3, 3, 1024, 1024),
    "deconv5": (4, 4, 1024, 512), "deconv4": (4, 4, 1026, 256),
    "deconv3": (4, 4, 770, 128),  "deconv2": (4, 4, 386, 64),
    "deconv1": (4, 4, 194, 2),    "deconv0": (4, 4, 68, 2),
    "predict_flow6": (3, 3, 1024, 2), "predict_flow5": (3, 3, 1026, 2),
    "predict_flow4": (3, 3, 770, 2),  "predict_flow3": (3, 3, 386, 2),
    "predict_flow2": (3, 3, 194, 2),  "predict_flow1": (3, 3, 68, 2),
    "predict_flow0": (3, 3, 6, 2),
    "up6to5": (4, 4, 2, 2), "up5to4": (4, 4, 2, 2), "up4to3": (4, 4, 2, 2),
    "up3to2": (4, 4, 2, 2), "up2to1": (4, 4, 2, 2), "up1to0": (4, 4, 2, 2),
}

_CONV_STRIDES = {"conv1": 2, "conv2": 2, "conv3": 2, "conv3_1": 1,
                 "conv4": 2, "conv4_1": 1, "conv5": 2, "conv5_1": 1,
                 "conv6": 2, "conv6_1": 1}
_PALLAS_DECONVS = ("deconv5", "deconv4", "deconv3", "deconv2")
_LAX_DECONVS = ("deconv1", "deconv0",
                "up6to5", "up5to4", "up4to3", "up3to2", "up2to1", "up1to0")
_PREDICTS = tuple(f"predict_flow{i}" for i in range(7))


def _kaiming(key, shape, a=0.1):
    kh, kw, cin, cout = shape
    fan_in = kh * kw * cin
    gain = math.sqrt(2.0 / (1.0 + a * a))
    std = gain / math.sqrt(fan_in)
    return std * jax.random.normal(key, shape, dtype=jnp.float32)


def init_params(key):
    keys = jax.random.split(key, len(_PARAM_SPECS))
    return {name: _kaiming(k, shape)
            for (name, shape), k in zip(_PARAM_SPECS.items(), keys)}


def _pack_matrix(wm_f32, scale=None):
    """f32 (K, N) -> bf16 (Kp, Np), optional per-layer scale folded in."""
    K, N = wm_f32.shape
    tn, Np = _pick_n_tiling(N)
    _, Kp = _pick_k_tiling(K, tn)
    if scale is not None:
        wm_f32 = wm_f32 * scale
    wm = wm_f32.astype(jnp.bfloat16)
    if (Kp, Np) != (K, N):
        wm = jnp.pad(wm, ((0, Kp - K), (0, Np - N)))
    return wm


def prepare_params(raw):
    """One-time packing (outside the jitted forward): bf16 cast, reshape,
    BN-scale fold, tile padding, deconv phase pre-slicing."""
    packed = {}
    for name in _CONV_STRIDES:
        kh, kw, cin, cout = _PARAM_SPECS[name]
        wm = raw[name].reshape(kh * kw * cin, cout)
        # Eval-mode BN (gamma=1, beta=0, running stats default) folds to a
        # constant per-channel scale; a trained per-channel gamma/rstd would
        # fold into the weight columns the same way.
        packed[name] = _pack_matrix(wm, scale=_BN_SCALE)
    for name in _PALLAS_DECONVS:
        w = raw[name]                                  # (4,4,cin,cout) equiv-conv
        cin, cout = w.shape[2], w.shape[3]
        phases = [_pack_matrix(w[py::2, px::2, :, :].reshape(4 * cin, cout))
                  for py in range(2) for px in range(2)]
        packed[name] = jnp.stack(phases, axis=0)       # (4, Kp, Np)
    for name in _LAX_DECONVS + _PREDICTS:
        packed[name] = raw[name].astype(jnp.bfloat16)  # tiny layers: HWIO bf16
    return packed


# ----------------------------------------------------------------------------
# Layer wrappers.
# ----------------------------------------------------------------------------
def _leaky(y, alpha):
    if alpha == 1.0:
        return y
    return jnp.where(y >= 0.0, y, alpha * y)


def _im2col(x, kh, kw, stride, pad):
    n, h, w, c = x.shape
    if pad:
        x = jnp.pad(x, ((0, 0), (pad, pad), (pad, pad), (0, 0)))
    ho = (h + 2 * pad - kh) // stride + 1
    wo = (w + 2 * pad - kw) // stride + 1
    cols = []
    for i in range(kh):
        for j in range(kw):
            cols.append(x[:, i:i + stride * ho:stride, j:j + stride * wo:stride, :])
    cols = jnp.concatenate(cols, axis=-1)               # (n, ho, wo, kh*kw*c)
    return cols.reshape(n * ho * wo, kh * kw * c), (n, ho, wo)


def conv_block(x, packed, name):
    """Conv2d(bias=False) + BN(eval, folded into weights) + LeakyReLU(0.1)."""
    kh, kw, cin, cout = _PARAM_SPECS[name]
    stride = _CONV_STRIDES[name]
    pad = (kh - 1) // 2
    cols, (n, ho, wo) = _im2col(x, kh, kw, stride, pad)
    y = fused_matmul(cols[None], packed[name][None], kh * kw * cin, cout,
                     alpha=_LEAKY_ALPHA, out_dtype=_ACT_DTYPE)
    return y[0].reshape(n, ho, wo, cout)


def deconv_block(x, packed, name):
    """ConvTranspose2d(4,2,1,bias=False) + LeakyReLU(0.1) as a 4-phase subpixel
    decomposition; all 4 phases run in one batched pallas_call."""
    _, _, cin, cout = _PARAM_SPECS[name]
    n, h, w, c = x.shape
    assert c == cin
    xp = jnp.pad(x, ((0, 0), (1, 1), (1, 1), (0, 0)))
    a_phases = []
    for py in range(2):
        for px in range(2):
            taps = [xp[:, py + dy:py + dy + h, px + dx:px + dx + w, :]
                    for dy in range(2) for dx in range(2)]
            a_phases.append(jnp.concatenate(taps, axis=-1).reshape(n * h * w, 4 * c))
    a = jnp.stack(a_phases, axis=0)                      # (4, n*h*w, 4*cin)
    y = fused_matmul(a, packed[name], 4 * cin, cout,
                     alpha=_LEAKY_ALPHA, out_dtype=_ACT_DTYPE)
    y = y.reshape(2, 2, n, h, w, cout)
    # interleave phases: out[n, 2m+py, 2j+px, :] = y[py, px, n, m, j, :]
    return jnp.transpose(y, (2, 3, 0, 4, 1, 5)).reshape(n, 2 * h, 2 * w, cout)


def deconv_lax(x, packed, name, alpha):
    """Tiny (Cout=2) ConvTranspose2d(4,2,1,bias=False): route around Pallas."""
    y = lax.conv_general_dilated(
        x, packed[name], window_strides=(1, 1), padding=((2, 2), (2, 2)),
        lhs_dilation=(2, 2), dimension_numbers=("NHWC", "HWIO", "NHWC"),
        preferred_element_type=jnp.float32)
    return _leaky(y, alpha).astype(_ACT_DTYPE)


def predict_flow(x, packed, name, out_dtype=_ACT_DTYPE):
    """Conv2d(in, 2, 3, 1, 1, bias=False), no activation (Cout=2 -> lax path)."""
    y = lax.conv_general_dilated(
        x, packed[name], window_strides=(1, 1), padding=((1, 1), (1, 1)),
        dimension_numbers=("NHWC", "HWIO", "NHWC"),
        preferred_element_type=jnp.float32)
    return y.astype(out_dtype)


def crop(x, target):
    return x[:, :target.shape[1], :target.shape[2], :]


# ----------------------------------------------------------------------------
# Forward pass (eval mode -> returns flow0).
# ----------------------------------------------------------------------------
def particle_net_forward(x_nchw, packed):
    x = jnp.transpose(x_nchw, (0, 2, 3, 1)).astype(_ACT_DTYPE)   # NCHW -> NHWC

    c1 = conv_block(x, packed, "conv1")
    c2 = conv_block(c1, packed, "conv2")
    c3 = conv_block(conv_block(c2, packed, "conv3"), packed, "conv3_1")
    c4 = conv_block(conv_block(c3, packed, "conv4"), packed, "conv4_1")
    c5 = conv_block(conv_block(c4, packed, "conv5"), packed, "conv5_1")
    c6 = conv_block(conv_block(c5, packed, "conv6"), packed, "conv6_1")

    flow6 = predict_flow(c6, packed, "predict_flow6")
    flow6_up = crop(deconv_lax(flow6, packed, "up6to5", alpha=1.0), c5)
    d5 = crop(deconv_block(c6, packed, "deconv5"), c5)
    cat5 = jnp.concatenate([c5, d5, flow6_up], axis=-1)

    flow5 = predict_flow(cat5, packed, "predict_flow5")
    flow5_up = crop(deconv_lax(flow5, packed, "up5to4", alpha=1.0), c4)
    d4 = crop(deconv_block(cat5, packed, "deconv4"), c4)
    cat4 = jnp.concatenate([c4, d4, flow5_up], axis=-1)

    flow4 = predict_flow(cat4, packed, "predict_flow4")
    flow4_up = crop(deconv_lax(flow4, packed, "up4to3", alpha=1.0), c3)
    d3 = crop(deconv_block(cat4, packed, "deconv3"), c3)
    cat3 = jnp.concatenate([c3, d3, flow4_up], axis=-1)

    flow3 = predict_flow(cat3, packed, "predict_flow3")
    flow3_up = crop(deconv_lax(flow3, packed, "up3to2", alpha=1.0), c2)
    d2 = crop(deconv_block(cat3, packed, "deconv2"), c2)
    cat2 = jnp.concatenate([c2, d2, flow3_up], axis=-1)

    flow2 = predict_flow(cat2, packed, "predict_flow2")
    flow2_up = crop(deconv_lax(flow2, packed, "up2to1", alpha=1.0), c1)
    d1 = crop(deconv_lax(cat2, packed, "deconv1", alpha=_LEAKY_ALPHA), c1)
    cat1 = jnp.concatenate([c1, d1, flow2_up], axis=-1)

    flow1 = predict_flow(cat1, packed, "predict_flow1")
    flow1_up = crop(deconv_lax(flow1, packed, "up1to0", alpha=1.0), x)
    d0 = crop(deconv_lax(cat1, packed, "deconv0", alpha=_LEAKY_ALPHA), x)
    cat0 = jnp.concatenate([x, d0, flow1_up], axis=-1)

    flow0 = predict_flow(cat0, packed, "predict_flow0", out_dtype=jnp.float32)
    return jnp.transpose(flow0, (0, 3, 1, 2))                    # NHWC -> NCHW


# ----------------------------------------------------------------------------
# Main.
# ----------------------------------------------------------------------------
if __name__ == "__main__":
    key = jax.random.PRNGKey(0)
    pkey, xkey, skey = jax.random.split(key, 3)

    # --- small self-check of the fused Pallas matmul against plain jnp -------
    ka, kb = jax.random.split(skey)
    a_chk = jax.random.normal(ka, (1, 64, 200), dtype=jnp.float32)
    w_chk = jax.random.normal(kb, (200, 192), dtype=jnp.float32)
    b_chk = _pack_matrix(w_chk)                              # bf16, padded
    got = fused_matmul(a_chk, b_chk[None], 200, 192, alpha=1.0,
                       out_dtype=jnp.float32)
    ref = jnp.einsum("gmk,kn->gmn",
                     a_chk.astype(jnp.bfloat16).astype(jnp.float32),
                     w_chk.astype(jnp.bfloat16).astype(jnp.float32))
    assert jnp.allclose(got, ref, rtol=1e-2, atol=1e-2), "matmul kernel mismatch"

    # --- full forward --------------------------------------------------------
    raw_params = init_params(pkey)
    packed_params = prepare_params(raw_params)               # one-time packing

    # Input: NCHW, 2 channels (the encoder starts with conv(2 -> 64)).
    # Spatial 64x64 so the 6 stride-2 convs bottom out at 1x1.
    x = jax.random.normal(xkey, (2, 2, 64, 64), dtype=jnp.float32)

    fwd = jax.jit(particle_net_forward)
    flow0 = fwd(x, packed_params)
    jax.block_until_ready(flow0)
    assert flow0.shape == (2, 2, 64, 64), flow0.shape
    assert bool(jnp.all(jnp.isfinite(flow0)))
    print("KERNEL_OK")
</pallas_src>

<mosaic_0001>
module attributes {stable_mosaic.version = 11 : i64} {
  func.func @_mm_kernel(%arg0: i32, %arg1: i32, %arg2: i32, %arg3: i32, %arg4: memref<1x64x256xbf16, #tpu.memory_space<vmem>>, %arg5: memref<1x256x128xbf16, #tpu.memory_space<vmem>>, %arg6: memref<1x64x128xf32, #tpu.memory_space<vmem>>) attributes {dimension_semantics = [#tpu.dimension_semantics<parallel>, #tpu.dimension_semantics<parallel>, #tpu.dimension_semantics<parallel>, #tpu.dimension_semantics<arbitrary>], iteration_bounds = array<i64: 1, 1, 2, 1>, scalar_prefetch = 0 : i64, scratch_operands = 0 : i64, tpu.core_type = #tpu.core_type<tc>, window_params = [{transform_indices = @transform_0, window_bounds = array<i64: 1, 64, 256>}, {transform_indices = @transform_1, window_bounds = array<i64: 1, 256, 128>}, {transform_indices = @transform_2, window_bounds = array<i64: 1, 64, 128>}]} {
    %c0 = arith.constant 0 : index
    %c0_0 = arith.constant 0 : index
    %c0_1 = arith.constant 0 : index
    %0 = vector.load %arg4[%c0, %c0_0, %c0_1] : memref<1x64x256xbf16, #tpu.memory_space<vmem>>, vector<1x64x256xbf16>
    %1 = vector.shape_cast %0 : vector<1x64x256xbf16> to vector<64x256xbf16>
    %c0_2 = arith.constant 0 : index
    %c0_3 = arith.constant 0 : index
    %c0_4 = arith.constant 0 : index
    %2 = vector.load %arg5[%c0_2, %c0_3, %c0_4] : memref<1x256x128xbf16, #tpu.memory_space<vmem>>, vector<1x256x128xbf16>
    %3 = vector.shape_cast %2 : vector<1x256x128xbf16> to vector<256x128xbf16>
    %cst = arith.constant dense<0.000000e+00> : vector<64x128xf32>
    %4 = tpu.matmul %1, %3, %cst {dimension_numbers = #tpu.dot_dimension_numbers<[1], [0], [0], [1], [0, 0, 1, 1], [], []>} : vector<64x256xbf16>, vector<256x128xbf16>, vector<64x128xf32> -> vector<64x128xf32>
    %c0_5 = arith.constant 0 : index
    %c0_6 = arith.constant 0 : index
    %c0_7 = arith.constant 0 : index
    %5 = vector.load %arg6[%c0_5, %c0_6, %c0_7] : memref<1x64x128xf32, #tpu.memory_space<vmem>>, vector<1x64x128xf32>
    %6 = vector.shape_cast %5 : vector<1x64x128xf32> to vector<64x128xf32>
    %7 = vector.shape_cast %4 : vector<64x128xf32> to vector<1x64x128xf32>
    tpu.vector_store %arg6[%c0_5, %c0_6, %c0_7], %7 {strides = array<i32>} : memref<1x64x128xf32, #tpu.memory_space<vmem>>, vector<1x64x128xf32>,
    return
  }
  func.func @transform_0(%arg0: i32, %arg1: i32, %arg2: i32, %arg3: i32) -> (i32, i32, i32) {
    %c0_i32 = arith.constant 0 : i32
    return %arg0, %arg1, %arg3 : i32, i32, i32
  }
  func.func @transform_1(%arg0: i32, %arg1: i32, %arg2: i32, %arg3: i32) -> (i32, i32, i32) {
    %c0_i32 = arith.constant 0 : i32
    return %arg0, %arg3, %arg2 : i32, i32, i32
  }
  func.func @transform_2(%arg0: i32, %arg1: i32, %arg2: i32, %arg3: i32) -> (i32, i32, i32) {
    %c0_i32 = arith.constant 0 : i32
    return %arg0, %arg1, %arg2 : i32, i32, i32
  }
}

</mosaic_0001>

<llo_original>
// kernel: tpu_custom_call.1
$region0: #{tpu_custom_call.1}
  #allocation0 [shape = 'u32[]', space=smem, size = 0x4, offset = 0x4, fixed_abs, tag = 'smem constant byte address 0x4 - core index']
  #allocation1 [shape = 'u32[144,128]{1,0:T(1,128)}', space=vmem, size = 0x12000, scoped, tag = 'internal scratch']
  %s0 = inlined_call_operand.hbm [shape: bf16[1,64,256], index: 0, kind: input, shape index: {}]
  %s1 = inlined_call_operand.hbm [shape: bf16[1,256,256], index: 1, kind: input, shape index: {}]
  %s2 = inlined_call_operand.hbm [shape: f32[1,64,256], index: 2, kind: output, shape index: {}]
  %s3 = sld [smem:[#allocation0]]
  $region49: #{tpu_custom_call.1} parent=0
    _
  %s5 = ssub.s32 1, %s3
  %s6 = scalar_select 0, %s5, %s3
  $region1: #{tpu_custom_call.1} parent=0
    #allocation2 [shape = 'u8[32768]{0}', space=vmem, size = 0x8000, scoped, tag = 'input window, operand 0, single buffered']
    #allocation3 [shape = 's32[2]{0}', space=sflag, size = 0x8, scoped, tag = 'scoped memory for tpu_custom_call.1']
    #allocation4 [shape = 's32[2]{0}', space=sflag, size = 0x8, scoped, tag = 'scoped memory for tpu_custom_call.1']
    #allocation5 [shape = 'u8[131072]{0}', space=vmem, size = 0x20000, scoped, tag = 'input window, operand 1']
    #allocation6 [shape = 's32[2]{0}', space=sflag, size = 0x8, scoped, tag = 'scoped memory for tpu_custom_call.1']
    #allocation7 [shape = 'u8[65536]{0}', space=vmem, size = 0x10000, scoped, tag = 'output window, operand 0']
    %7 = vsyncpa [#allocation3], 0
    %8 = vsyncpa [#allocation6], 0
    %s9 = scalar_lea.sflag [#allocation6], 1
    %10 = vsyncpa %s9, 0
    %11 = vsyncpa [#allocation4], 0
    %s12 = scalar_lea.sflag [#allocation4], 1
    %13 = vsyncpa %s12, 0
    loop: start=0, step=1, limit=4
    $region2: #{tpu_custom_call.1} parent=1 // loop_pre_header
      _
    $region3: #{tpu_custom_call.1} parent=1 // loop_header
      %s15 = sphi 0, %s19
      %p16 = scmp.ge.s32.totalorder %s15, 4
      %s22 = sphi 0, %s48
      %s23 = sphi 0, %s44
      %s24 = sphi 0, %s40
      %s25 = sphi 0, %s36
      %s26 = sphi 0, %s22
      %s27 = sphi 0, %s23
      %s28 = sphi 0, %s24
      %s29 = sphi 0, %s25
      %s30 = sphi 0, %s26
      %s31 = sphi 0, %s27
      %s32 = sphi 0, %s28
      %s33 = sphi 0, %s29
      %s55 = sphi 0, %s57
      %s58 = sphi 0, %s55
      %s59 = sphi 0, %s58
      %s75 = sphi 0, %s59
      %s85 = sphi 0, %s87
      %s88 = sphi 0, %s85
      %s89 = sphi 0, %s88
      %s105 = sphi 0, %s89
      %s115 = sphi 0, %s117
      %s118 = sphi 0, %s115
      %s119 = sphi 0, %s118
      %s135 = sphi 0, %s119
    $region4: #{tpu_custom_call.1} parent=1 // loop_header_branch
      %18 = sbr.rel (%p16) target = $region8
    $region5: #{tpu_custom_call.1} parent=1 // loop_body
      %s20 = ssub.s32 %s15, 1
      %s21 = ssub.s32 %s15, 2
      %s34 = sadd.s32 1, %s25
      %p35 = scmp.ge.s32.totalorder %s34, 1
      %s36 = scalar_select %p35, 0, %s34
      %s37 = sadd.s32 1, %s24
      %s38 = scalar_select %p35, %s37, %s24
      %p39 = scmp.ge.s32.totalorder %s38, 2
      %s40 = scalar_select %p39, 0, %s38
      %s41 = sadd.s32 1, %s23
      %s42 = scalar_select %p39, %s41, %s23
      %p43 = scmp.ge.s32.totalorder %s42, 1
      %s44 = scalar_select %p43, 0, %s42
      %s45 = sadd.s32 1, %s22
      %s46 = scalar_select %p43, %s45, %s22
      %p47 = scmp.ge.s32.totalorder %s46, 1
      %s48 = scalar_select %p47, 0, %s46
      %s49 = ssub.s32 %s22, %s48
      %s50 = ssub.s32 %s23, %s44
      %s51 = sor.u32 %s49, %s50
      %s52 = ssub.s32 %s25, %s36
      %s53 = sor.u32 %s51, %s52
      %p54 = scmp.eq.s32.totalorder %s53, 0
      %s56 = sadd.s32 %s55, 1
      %s57 = scalar_select %p54, %s55, %s56
      %p60 = pneg %p54
      %p61 = scmp.eq.s32.totalorder %s15, 1
      %p62 = por %p60, %p61
      %p63 = scmp.ne.s32.totalorder %s55, %s58
      %p64 = scmp.eq.s32.totalorder %s15, 0
      %p65 = por %p63, %p64
      %p66 = scmp.ne.s32.totalorder %s55, %s58
      %p67 = scmp.eq.s32.totalorder %s20, 1
      %p68 = por %p66, %p67
      %p69 = scmp.ne.s32.totalorder %s58, %s59
      %p70 = scmp.eq.s32.totalorder %s20, 0
      %p71 = por %p69, %p70
      %p72 = scmp.ne.s32.totalorder %s58, %s59
      %p73 = scmp.eq.s32.totalorder %s21, 1
      %p74 = por %p72, %p73
      %p76 = scmp.ne.s32.totalorder %s59, %s75
      %p77 = scmp.eq.s32.totalorder %s21, 0
      %p78 = por %p76, %p77
      %s79 = ssub.s32 %s22, %s48
      %s80 = ssub.s32 %s25, %s36
      %s81 = sor.u32 %s79, %s80
      %s82 = ssub.s32 %s24, %s40
      %s83 = sor.u32 %s81, %s82
      %p84 = scmp.eq.s32.totalorder %s83, 0
      %s86 = sadd.s32 %s85, 1
      %s87 = scalar_select %p84, %s85, %s86
      %p90 = pneg %p84
      %p91 = scmp.eq.s32.totalorder %s15, 1
      %p92 = por %p90, %p91
      %p93 = scmp.ne.s32.totalorder %s85, %s88
      %p94 = scmp.eq.s32.totalorder %s15, 0
      %p95 = por %p93, %p94
      %p96 = scmp.ne.s32.totalorder %s85, %s88
      %p97 = scmp.eq.s32.totalorder %s20, 1
      %p98 = por %p96, %p97
      %p99 = scmp.ne.s32.totalorder %s88, %s89
      %p100 = scmp.eq.s32.totalorder %s20, 0
      %p101 = por %p99, %p100
      %p102 = scmp.ne.s32.totalorder %s88, %s89
      %p103 = scmp.eq.s32.totalorder %s21, 1
      %p104 = por %p102, %p103
      %p106 = scmp.ne.s32.totalorder %s89, %s105
      %p107 = scmp.eq.s32.totalorder %s21, 0
      %p108 = por %p106, %p107
      %s109 = ssub.s32 %s22, %s48
      %s110 = ssub.s32 %s23, %s44
      %s111 = sor.u32 %s109, %s110
      %s112 = ssub.s32 %s24, %s40
      %s113 = sor.u32 %s111, %s112
      %p114 = scmp.eq.s32.totalorder %s113, 0
      %s116 = sadd.s32 %s115, 1
      %s117 = scalar_select %p114, %s115, %s116
      %p120 = pneg %p114
      %p121 = scmp.eq.s32.totalorder %s15, 1
      %p122 = por %p120, %p121
      %p123 = scmp.ne.s32.totalorder %s115, %s118
      %p124 = scmp.eq.s32.totalorder %s15, 0
      %p125 = por %p123, %p124
      %p126 = scmp.ne.s32.totalorder %s115, %s118
      %p127 = scmp.eq.s32.totalorder %s20, 1
      %p128 = por %p126, %p127
      %p129 = scmp.ne.s32.totalorder %s118, %s119
      %p130 = scmp.eq.s32.totalorder %s20, 0
      %p131 = por %p129, %p130
      %p132 = scmp.ne.s32.totalorder %s118, %s119
      %p133 = scmp.eq.s32.totalorder %s21, 1
      %p134 = por %p132, %p133
      %p136 = scmp.ne.s32.totalorder %s119, %s135
      %p137 = scmp.eq.s32.totalorder %s21, 0
      %p138 = por %p136, %p137
      %p139 = scmp.le.s32.totalorder 1, %s15
      %p140 = scmp.lt.s32.totalorder %s15, 3
      %p141 = pnand %p139, %p140
      %p142 = pneg %p141
      // Predicated region
      $region9: #{tpu_custom_call.1} parent=5 // pred_check
        _
      $region10: #{tpu_custom_call.1} parent=5 // pred_check_branch
        %144 = sbr.rel (%p141) target = $region12
      $region11: #{tpu_custom_call.1} parent=5 // pred_region
        %s145 = ssub.s32 %s15, 1
        // Predicated region
        $region13: #{tpu_custom_call.1} parent=11 // pred_check
          %p146 = pneg %p71
        $region14: #{tpu_custom_call.1} parent=11 // pred_check_branch
          %148 = sbr.rel (%p146) target = $region16
        $region15: #{tpu_custom_call.1} parent=11 // pred_region
          %s149 = smul.u32 8, %s27
          %s150 = smul.u32 2, %s29
          %s152 = ssub.s32 1024, 1024
          %153 = vsyncadd [#allocation3], %s152
          %s154 = smul.addr %s149, 2
          %s155 = sadd.s32 %s150, %s154
          %s156 = smul.addr %s26, 16
          %s157 = sadd.s32 %s155, %s156
          %s158 = smul.addr %s157, 64
          %s159 = scalar_lea.hbm %s0, %s158
          %s160 = sshll.u32 [#allocation2], 4
          %s161 = int_to_ptr.vmem [resolvable:$true] %s160
          %166 = dma.hbm_to_vmem [thread:$0]  %s159, 1024, %s161, [#allocation3], 128, 128, 8
        $region16: #{tpu_custom_call.1} parent=11 // pred_fallthru
          _
      $region12: #{tpu_custom_call.1} parent=5 // pred_fallthru
        _
      %p167 = scmp.lt.s32.totalorder %s15, 2
      // Predicated region
      $region17: #{tpu_custom_call.1} parent=5 // pred_check
        %p168 = pneg %p167
      $region18: #{tpu_custom_call.1} parent=5 // pred_check_branch
        %170 = sbr.rel (%p168) target = $region20
      $region19: #{tpu_custom_call.1} parent=5 // pred_region
        // Predicated region
        $region21: #{tpu_custom_call.1} parent=19 // pred_check
          %p171 = pneg %p95
        $region22: #{tpu_custom_call.1} parent=19 // pred_check_branch
          %173 = sbr.rel (%p171) target = $region24
        $region23: #{tpu_custom_call.1} parent=19 // pred_region
          %s174 = sand.u32 %s85, 1
          %s175 = scalar_lea.sflag [#allocation6], %s174
          %s176 = sand.u32 %s85, 1
          %s177 = smul.addr %s176, 128
          %s178 = scalar_lea.vmem [#allocation5], %s177
          %s179 = smul.u32 32, %s25
          %s181 = ssub.s32 2048, 2048
          %182 = vsyncadd %s175, %s181
          %s183 = smul.addr %s179, 2
          %s184 = sadd.s32 %s24, %s183
          %s185 = smul.addr %s22, 64
          %s186 = sadd.s32 %s184, %s185
          %s187 = smul.addr %s186, 64
          %s188 = scalar_lea.hbm %s1, %s187
          %s189 = sshll.u32 %s178, 4
          %s190 = int_to_ptr.vmem [resolvable:$true] %s189
          %195 = dma.hbm_to_vmem [thread:$0]  %s188, 2048, %s190, %s175, 128, 64, 4
        $region24: #{tpu_custom_call.1} parent=19 // pred_fallthru
          _
      $region20: #{tpu_custom_call.1} parent=5 // pred_fallthru
        _
      %p196 = scmp.le.s32.totalorder 1, %s15
      %p197 = scmp.lt.s32.totalorder %s15, 3
      %p198 = pnand %p196, %p197
      %p199 = pneg %p198
      // Predicated region
      $region25: #{tpu_custom_call.1} parent=5 // pred_check
        _
      $region26: #{tpu_custom_call.1} parent=5 // pred_check_branch
        %201 = sbr.rel (%p198) target = $region28
      $region27: #{tpu_custom_call.1} parent=5 // pred_region
        %s202 = ssub.s32 %s15, 1
        // Predicated region
        $region29: #{tpu_custom_call.1} parent=27 // pred_check
          %p203 = pneg %p71
        $region30: #{tpu_custom_call.1} parent=27 // pred_check_branch
          %205 = sbr.rel (%p203) target = $region32
        $region31: #{tpu_custom_call.1} parent=27 // pred_region
          %206 = dma.done [#allocation3], 1024
        $region32: #{tpu_custom_call.1} parent=27 // pred_fallthru
          _
        %s207 = sand.u32 %s88, 1
        %s208 = scalar_lea.sflag [#allocation6], %s207
        %s209 = sand.u32 %s88, 1
        %s210 = smul.addr %s209, 128
        %s211 = scalar_lea.vmem [#allocation5], %s210
        // Predicated region
        $region33: #{tpu_custom_call.1} parent=27 // pred_check
          %p212 = pneg %p101
        $region34: #{tpu_custom_call.1} parent=27 // pred_check_branch
          %214 = sbr.rel (%p212) target = $region36
        $region35: #{tpu_custom_call.1} parent=27 // pred_region
          %215 = dma.done %s208, 2048
        $region36: #{tpu_custom_call.1} parent=27 // pred_fallthru
          _
        %p216 = pneg %p71
        %p217 = pneg %p68
        %s218 = sand.u32 %s88, 1
        %s219 = scalar_lea.sflag [#allocation6], %s218
        %s220 = sand.u32 %s88, 1
        %s221 = smul.addr %s220, 128
        %s222 = scalar_lea.vmem [#allocation5], %s221
        %p223 = pneg %p101
        %p224 = pneg %p98
        %p225 = pneg %p131
        %p226 = pneg %p128
        %s227 = sand.u32 %s118, 1
        %s228 = scalar_lea.sflag [#allocation4], %s227
        %s229 = sand.u32 %s118, 1
        %s230 = smul.addr %s229, 64
        %s231 = scalar_lea.vmem [#allocation7], %s230
        %s232 = smul.u32 8, %s27
        %s233 = smul.u32 2, %s29
        %s234 = smul.u32 32, %s29
        %s235 = smul.u32 8, %s27
        %v237 = vld [vmem:[#allocation2] sm:$0xff]
        %v238 = vld [vmem:[#allocation2 + $0x8] sm:$0xff]
        %v239 = vld [vmem:[#allocation2 + $0x10] sm:$0xff]
        %v240 = vld [vmem:[#allocation2 + $0x18] sm:$0xff]
        %v241 = vld [vmem:[#allocation2 + $0x20] sm:$0xff]
        %v242 = vld [vmem:[#allocation2 + $0x28] sm:$0xff]
        %v243 = vld [vmem:[#allocation2 + $0x30] sm:$0xff]
        %v244 = vld [vmem:[#allocation2 + $0x38] sm:$0xff]
        %v245 = vld [vmem:[%s211] sm:$0xf]
        %v246 = vld [vmem:[%s211 + $0x4] sm:$0xf]
        %v247 = vld [vmem:[%s211 + $0x8] sm:$0xf]
        %v248 = vld [vmem:[%s211 + $0xc] sm:$0xf]
        %v249 = vld [vmem:[%s211 + $0x10] sm:$0xf]
        %v250 = vld [vmem:[%s211 + $0x14] sm:$0xf]
        %v251 = vld [vmem:[%s211 + $0x18] sm:$0xf]
        %v252 = vld [vmem:[%s211 + $0x1c] sm:$0xf]
        %v253 = vld [vmem:[%s211 + $0x20] sm:$0xf]
        %v254 = vld [vmem:[%s211 + $0x24] sm:$0xf]
        %v255 = vld [vmem:[%s211 + $0x28] sm:$0xf]
        %v256 = vld [vmem:[%s211 + $0x2c] sm:$0xf]
        %v257 = vld [vmem:[%s211 + $0x30] sm:$0xf]
        %v258 = vld [vmem:[%s211 + $0x34] sm:$0xf]
        %v259 = vld [vmem:[%s211 + $0x38] sm:$0xf]
        %v260 = vld [vmem:[%s211 + $0x3c] sm:$0xf]
        %v261 = vld [vmem:[%s211 + $0x40] sm:$0xf]
        %v262 = vld [vmem:[%s211 + $0x44] sm:$0xf]
        %v263 = vld [vmem:[%s211 + $0x48] sm:$0xf]
        %v264 = vld [vmem:[%s211 + $0x4c] sm:$0xf]
        %v265 = vld [vmem:[%s211 + $0x50] sm:$0xf]
        %v266 = vld [vmem:[%s211 + $0x54] sm:$0xf]
        %v267 = vld [vmem:[%s211 + $0x58] sm:$0xf]
        %v268 = vld [vmem:[%s211 + $0x5c] sm:$0xf]
        %v269 = vld [vmem:[%s211 + $0x60] sm:$0xf]
        %v270 = vld [vmem:[%s211 + $0x64] sm:$0xf]
        %v271 = vld [vmem:[%s211 + $0x68] sm:$0xf]
        %v272 = vld [vmem:[%s211 + $0x6c] sm:$0xf]
        %v273 = vld [vmem:[%s211 + $0x70] sm:$0xf]
        %v274 = vld [vmem:[%s211 + $0x74] sm:$0xf]
        %v275 = vld [vmem:[%s211 + $0x78] sm:$0xf]
        %v276 = vld [vmem:[%s211 + $0x7c] sm:$0xf]
        %v285 = vunpack.c.l.b16 %v237
        %v286 = vunpack.c.h.b16 %v237
        %v287 = vunpack.c.l.b16 %v238
        %v288 = vunpack.c.h.b16 %v238
        %v289 = vunpack.c.l.b16 %v239
        %v290 = vunpack.c.h.b16 %v239
        %v291 = vunpack.c.l.b16 %v240
        %v292 = vunpack.c.h.b16 %v240
        %v293 = vunpack.c.l.b16 %v241
        %v294 = vunpack.c.h.b16 %v241
        %v295 = vunpack.c.l.b16 %v242
        %v296 = vunpack.c.h.b16 %v242
        %v297 = vunpack.c.l.b16 %v243
        %v298 = vunpack.c.h.b16 %v243
        %v299 = vunpack.c.l.b16 %v244
        %v300 = vunpack.c.h.b16 %v244
        %v301 = vpack.c.b16 %v287, %v285
        %v302 = vpack.c.b16 %v288, %v286
        %v303 = vpack.c.b16 %v291, %v289
        %v304 = vpack.c.b16 %v292, %v290
        %v305 = vpack.c.b16 %v295, %v293
        %v306 = vpack.c.b16 %v296, %v294
        %v307 = vpack.c.b16 %v299, %v297
        %v308 = vpack.c.b16 %v300, %v298
        %v349 = vunpack.c.l.b16 %v245
        %v350 = vunpack.c.l.b16 %v246
        %v351 = vunpack.c.l.b16 %v247
        %v352 = vunpack.c.l.b16 %v248
        %v353 = vunpack.c.l.b16 %v249
        %v354 = vunpack.c.l.b16 %v250
        %v355 = vunpack.c.l.b16 %v251
        %v356 = vunpack.c.l.b16 %v252
        %v357 = vunpack.c.l.b16 %v253
        %v358 = vunpack.c.l.b16 %v254
        %v359 = vunpack.c.l.b16 %v255
        %v360 = vunpack.c.l.b16 %v256
        %v361 = vunpack.c.l.b16 %v257
        %v362 = vunpack.c.l.b16 %v258
        %v363 = vunpack.c.l.b16 %v259
        %v364 = vunpack.c.l.b16 %v260
        %v365 = vunpack.c.l.b16 %v261
        %v366 = vunpack.c.l.b16 %v262
        %v367 = vunpack.c.l.b16 %v263
        %v368 = vunpack.c.l.b16 %v264
        %v369 = vunpack.c.l.b16 %v265
        %v370 = vunpack.c.l.b16 %v266
        %v371 = vunpack.c.l.b16 %v267
        %v372 = vunpack.c.l.b16 %v268
        %v373 = vunpack.c.l.b16 %v269
        %v374 = vunpack.c.l.b16 %v270
        %v375 = vunpack.c.l.b16 %v271
        %v376 = vunpack.c.l.b16 %v272
        %v377 = vunpack.c.l.b16 %v273
        %v378 = vunpack.c.l.b16 %v274
        %v379 = vunpack.c.l.b16 %v275
        %v380 = vunpack.c.l.b16 %v276
        %v381 = vpack.c.b16 %v350, %v349
        %v382 = vpack.c.b16 %v352, %v351
        %v383 = vpack.c.b16 %v354, %v353
        %v384 = vpack.c.b16 %v356, %v355
        %v385 = vpack.c.b16 %v358, %v357
        %v386 = vpack.c.b16 %v360, %v359
        %v387 = vpack.c.b16 %v362, %v361
        %v388 = vpack.c.b16 %v364, %v363
        %v389 = vpack.c.b16 %v366, %v365
        %v390 = vpack.c.b16 %v368, %v367
        %v391 = vpack.c.b16 %v370, %v369
        %v392 = vpack.c.b16 %v372, %v371
        %v393 = vpack.c.b16 %v374, %v373
        %v394 = vpack.c.b16 %v376, %v375
        %v395 = vpack.c.b16 %v378, %v377
        %v396 = vpack.c.b16 %v380, %v379
        %413 = vmatprep.subr.bf16.mxu0 0
        %414 = vmatpush1.bf16.msra.mxu0 %v381
        %415 = vmatprep.subr.bf16.mxu0 0
        %416 = vmatpush1.bf16.msra.mxu0 %v382
        %417 = vmatprep.subr.bf16.mxu0 0
        %418 = vmatpush1.bf16.msra.mxu0 %v383
        %419 = vmatprep.subr.bf16.mxu0 0
        %420 = vmatpush1.bf16.msra.mxu0 %v384
        %421 = vmatprep.subr.bf16.mxu0 0
        %422 = vmatpush1.bf16.msra.mxu0 %v385
        %423 = vmatprep.subr.bf16.mxu0 0
        %424 = vmatpush1.bf16.msra.mxu0 %v386
        %425 = vmatprep.subr.bf16.mxu0 0
        %426 = vmatpush1.bf16.msra.mxu0 %v387
        %427 = vmatprep.subr.bf16.mxu0 0
        %428 = vmatpush1.bf16.msra.mxu0 %v388
        %429 = vmatprep.subr.bf16.mxu0 0
        %430 = vmatpush1.bf16.msra.mxu0 %v389
        %431 = vmatprep.subr.bf16.mxu0 0
        %432 = vmatpush1.bf16.msra.mxu0 %v390
        %433 = vmatprep.subr.bf16.mxu0 0
        %434 = vmatpush1.bf16.msra.mxu0 %v391
        %435 = vmatprep.subr.bf16.mxu0 0
        %436 = vmatpush1.bf16.msra.mxu0 %v392
        %437 = vmatprep.subr.bf16.mxu0 0
        %438 = vmatpush1.bf16.msra.mxu0 %v393
        %439 = vmatprep.subr.bf16.mxu0 0
        %440 = vmatpush1.bf16.msra.mxu0 %v394
        %441 = vmatprep.subr.bf16.mxu0 0
        %442 = vmatpush1.bf16.msra.mxu0 %v395
        %443 = vmatprep.subr.bf16.mxu0 0
        %444 = vmatpush1.bf16.msra.mxu0 %v396
        %445 = vmatprep.mubr.bf16.mxu0 %v302
        %446 = vmatmul.mubr.bf16.gmra.mrb[0].mxu0 %v301
        %v447 = vpop.f32.mrb[0].mxu0
        %v448 = vadd.f32 0.0, %v447
        %v449 = vpop.f32.mrb[0].mxu0
        %v450 = vpop.f32.mrb[0].mxu0
        %v451 = vadd.f32 0.0, %v450
        %v452 = vpop.f32.mrb[0].mxu0
        %453 = vmatprep.mubr.bf16.mxu0 %v304
        %454 = vmatmul.mubr.bf16.gmra.mrb[0].mxu0 %v303
        %v455 = vpop.f32.mrb[0].mxu0
        %v456 = vadd.f32 0.0, %v455
        %v457 = vpop.f32.mrb[0].mxu0
        %v458 = vpop.f32.mrb[0].mxu0
        %v459 = vadd.f32 0.0, %v458
        %v460 = vpop.f32.mrb[0].mxu0
        %461 = vmatprep.mubr.bf16.mxu0 %v306
        %462 = vmatmul.mubr.bf16.gmra.mrb[0].mxu0 %v305
        %v463 = vpop.f32.mrb[0].mxu0
        %v464 = vadd.f32 0.0, %v463
        %v465 = vpop.f32.mrb[0].mxu0
        %v466 = vpop.f32.mrb[0].mxu0
        %v467 = vadd.f32 0.0, %v466
        %v468 = vpop.f32.mrb[0].mxu0
        %469 = vmatprep.mubr.bf16.mxu0 %v308
        %470 = vmatmul.mubr.bf16.gmra.mrb[0].mxu0 %v307
        %v471 = vpop.f32.mrb[0].mxu0
        %v472 = vadd.f32 0.0, %v471
        %v473 = vpop.f32.mrb[0].mxu0
        %v474 = vpop.f32.mrb[0].mxu0
        %v475 = vadd.f32 0.0, %v474
        %v476 = vpop.f32.mrb[0].mxu0
        %477 = vdwg.mxu0
        %478 = vst [vmem:[%s231] sm:$0xff] %v448
        %479 = vst [vmem:[%s231 + $0x8] sm:$0xff] %v451
        %480 = vst [vmem:[%s231 + $0x10] sm:$0xff] %v456
        %481 = vst [vmem:[%s231 + $0x18] sm:$0xff] %v459
        %482 = vst [vmem:[%s231 + $0x20] sm:$0xff] %v464
        %483 = vst [vmem:[%s231 + $0x28] sm:$0xff] %v467
        %484 = vst [vmem:[%s231 + $0x30] sm:$0xff] %v472
        %485 = vst [vmem:[%s231 + $0x38] sm:$0xff] %v475
        %s486 = sand.u32 %s118, 1
        %s487 = scalar_lea.sflag [#allocation4], %s486
        %s488 = sand.u32 %s118, 1
        %s489 = smul.addr %s488, 64
        %s490 = scalar_lea.vmem [#allocation7], %s489
        // Predicated region
        $region37: #{tpu_custom_call.1} parent=27 // pred_check
          %p491 = pneg %p128
        $region38: #{tpu_custom_call.1} parent=27 // pred_check_branch
          %493 = sbr.rel (%p491) target = $region40
        $region39: #{tpu_custom_call.1} parent=27 // pred_region
          %s494 = smul.u32 8, %s27
          %s496 = ssub.s32 1024, 1024
          %497 = vsyncadd %s487, %s496
          %s498 = smul.addr %s494, 2
          %s499 = sadd.s32 %s28, %s498
          %s500 = smul.addr %s26, 16
          %s501 = sadd.s32 %s499, %s500
          %s502 = smul.addr %s501, 128
          %s503 = scalar_lea.hbm %s2, %s502
          %s504 = sshll.u32 %s490, 4
          %s505 = int_to_ptr.vmem [resolvable:$true] %s504
          %510 = dma.vmem_to_hbm [thread:$0]  %s505, 1024, %s503, %s487, 128, 256, 8
        $region40: #{tpu_custom_call.1} parent=27 // pred_fallthru
          _
      $region28: #{tpu_custom_call.1} parent=5 // pred_fallthru
        _
      %p511 = scmp.le.s32.totalorder 2, %s15
      // Predicated region
      $region41: #{tpu_custom_call.1} parent=5 // pred_check
        %p512 = pneg %p511
      $region42: #{tpu_custom_call.1} parent=5 // pred_check_branch
        %514 = sbr.rel (%p512) target = $region44
      $region43: #{tpu_custom_call.1} parent=5 // pred_region
        %s515 = ssub.s32 %s15, 2
        // Predicated region
        $region45: #{tpu_custom_call.1} parent=43 // pred_check
          %p516 = pneg %p134
        $region46: #{tpu_custom_call.1} parent=43 // pred_check_branch
          %518 = sbr.rel (%p516) target = $region48
        $region47: #{tpu_custom_call.1} parent=43 // pred_region
          %s519 = sand.u32 %s119, 1
          %s520 = scalar_lea.sflag [#allocation4], %s519
          %s521 = sand.u32 %s119, 1
          %s522 = smul.addr %s521, 64
          %s523 = scalar_lea.vmem [#allocation7], %s522
          %524 = dma.done %s520, 1024
        $region48: #{tpu_custom_call.1} parent=43 // pred_fallthru
          _
      $region44: #{tpu_custom_call.1} parent=5 // pred_fallthru
        _
    $region6: #{tpu_custom_call.1} parent=1 // loop_footer
      %s19 = sadd.s32 1, %s15
    $region7: #{tpu_custom_call.1} parent=1 // loop_footer_branch
      %14 = sbr.rel target = $region3
    $region8: #{tpu_custom_call.1} parent=1 // loop_exit
      _
    %525 = vsyncpa [#allocation3], 1
    %s526 = scalar_lea.sflag [#allocation3], 1
    %527 = vsyncpa %s526, 1
    %528 = vsyncpa [#allocation6], 1
    %s529 = scalar_lea.sflag [#allocation6], 1
    %530 = vsyncpa %s529, 1
    %531 = vsyncpa [#allocation4], 1
    %s532 = scalar_lea.sflag [#allocation4], 1
    %533 = vsyncpa %s532, 1

</llo_original>
